<compile_context>
chip_gen: v5e
topology: v5e:2x2
jax: 0.10.0
libtpu: 0.0.40
codegen_flags: <defaults>
</compile_context>

<pallas_src>
import jax
import jax.numpy as jnp
from jax import lax
from jax.experimental import pallas as pl
from jax.experimental.pallas import tpu as pltpu


def _round_up(x, m):
    return ((x + m - 1) // m) * m


def _pick_tile(l_pad, max_tile):
    """Largest 128-multiple tile <= max_tile that divides l_pad."""
    for t in (1024, 512, 256, 128):
        if t <= max_tile and l_pad % t == 0:
            return t
    return 128


def _arc_biaffine_kernel(dep_ref, head_ref, u_ref, bias_ref, out_ref, tmp_ref):
    """One (b, i, j) grid step.

    dep_ref : (1, TM, H)  compute dtype  -- dep tile for row-block i
    head_ref: (1, TN, H)  compute dtype  -- head tile for col-block j
    u_ref   : (H, H)      compute dtype  -- full U, grid-invariant
    bias_ref: (1, H)      f32            -- bias row (zeros if has_bias=False)
    out_ref : (1, TM, TN) out dtype
    tmp_ref : (TM, H)     compute dtype  -- scratch caching (dep_tile @ U + bias)
    """
    # tmp depends only on (b, i): recompute only when the innermost j axis
    # restarts.  Bias fold:
    #   out[i,j] = sum_h ((dep@U)[i,h] + bias[h]) * head[j,h]
    @pl.when(pl.program_id(2) == 0)
    def _():
        t = lax.dot_general(
            dep_ref[0], u_ref[...],
            dimension_numbers=(((1,), (0,)), ((), ())),
            preferred_element_type=jnp.float32)            # MXU, f32 accum
        tmp_ref[...] = (t + bias_ref[...]).astype(tmp_ref.dtype)

    # tmp @ head^T without an explicit transpose: contract the last dims
    # (same NT pattern as einsum 'qh,kh->qk'; lowers without vxpose).
    out = lax.dot_general(
        tmp_ref[...], head_ref[0],
        dimension_numbers=(((1,), (1,)), ((), ())),
        preferred_element_type=jnp.float32)                # MXU, f32 accum
    out_ref[0] = out.astype(out_ref.dtype)


def arc_biaffine(head, dep, U, bias=None, *, tile=512, out_dtype=None,
                 mxu_bf16=True):
    """head, dep: [B, L, H]; U: [H, H]; bias: [H] or None.  Returns [B, L, L].

    tile     : max tile edge for the (L, L) output (512 default; 1024 is a good
               choice on v5e/v6e for large L to halve head re-reads).
    out_dtype: dtype of the returned scores (default: head.dtype).  Passing
               jnp.bfloat16 halves output HBM writeback if the consumer allows.
    mxu_bf16 : feed the MXU bf16 operands (f32 accumulation).  Set False for a
               pure-f32 path if the double rounding at large H matters.
    """
    B, L, H = head.shape
    if out_dtype is None:
        out_dtype = head.dtype
    compute_dtype = jnp.bfloat16 if mxu_bf16 else jnp.float32
    cbytes = jnp.dtype(compute_dtype).itemsize
    obytes = jnp.dtype(out_dtype).itemsize

    if bias is None:
        # With the algebraic fold, a zero bias is just a (hidden) VPU add of 0.
        bias = jnp.zeros((H,), dtype=jnp.float32)

    # Tile-divisor-aware padding: pad L only to a 128 multiple, then pick the
    # largest tile that divides it -> wasted rows/cols are bounded by <128.
    L_pad = _round_up(L, 128)
    H_pad = _round_up(H, 128)
    TM = _pick_tile(L_pad, tile)
    TN = _pick_tile(L_pad, min(tile, 512))
    # v7x megacore: make sure the "parallel" (b, i) axes have >=2 blocks so
    # both TensorCores get work on small-batch / short-sequence shapes.
    while B * (L_pad // TM) < 2 and TM > 128:
        TM //= 2  # still divides L_pad (tiles are 128 * power-of-two)

    def pad_blh(x):
        return jnp.pad(x, ((0, 0), (0, L_pad - L), (0, H_pad - H)))

    dep_p = pad_blh(dep).astype(compute_dtype)
    head_p = pad_blh(head).astype(compute_dtype)
    U_p = jnp.pad(U, ((0, H_pad - H), (0, H_pad - H))).astype(compute_dtype)
    bias_p = jnp.pad(bias.astype(jnp.float32), (0, H_pad - H)).reshape(1, H_pad)

    grid = (B, L_pad // TM, L_pad // TN)

    # HBM traffic: dep read once per (b, i) block, head re-read once per i
    # block, U/bias once, padded output written once.
    flops = int(2 * B * (L_pad * H_pad * H_pad + L_pad * L_pad * H_pad))
    bytes_accessed = int(
        B * L_pad * H_pad * cbytes                        # dep
        + B * (L_pad // TM) * L_pad * H_pad * cbytes      # head (re-reads)
        + H_pad * H_pad * cbytes + H_pad * 4              # U + bias
        + B * L_pad * L_pad * obytes)                     # output writeback

    # Per-step VMEM footprint (default double-buffering) + headroom, capped at
    # 48 MiB so the limit is also valid on v7x (64 MiB physical VMEM).
    vmem_bytes = (2 * (TM + TN) * H_pad * cbytes          # dep + head tiles
                  + 2 * H_pad * H_pad * cbytes            # U
                  + 2 * H_pad * 4                         # bias
                  + 2 * TM * TN * obytes                  # out tile
                  + TM * H_pad * cbytes)                  # tmp scratch
    vmem_limit = int(max(32 << 20, min(48 << 20, vmem_bytes + (8 << 20))))

    out_p = pl.pallas_call(
        _arc_biaffine_kernel,
        out_shape=jax.ShapeDtypeStruct((B, L_pad, L_pad), out_dtype),
        grid_spec=pltpu.PrefetchScalarGridSpec(
            num_scalar_prefetch=0,
            grid=grid,
            in_specs=[
                pl.BlockSpec((1, TM, H_pad), lambda b, i, j: (b, i, 0)),  # dep
                pl.BlockSpec((1, TN, H_pad), lambda b, i, j: (b, j, 0)),  # head
                pl.BlockSpec((H_pad, H_pad), lambda b, i, j: (0, 0)),     # U
                pl.BlockSpec((1, H_pad), lambda b, i, j: (0, 0)),         # bias
            ],
            out_specs=pl.BlockSpec((1, TM, TN), lambda b, i, j: (b, i, j)),
            scratch_shapes=[pltpu.VMEM((TM, H_pad), compute_dtype)],
        ),
        compiler_params=pltpu.CompilerParams(
            # j carries the cached tmp scratch -> "arbitrary"; b and i are
            # fully independent -> "parallel" (megacore sharding beyond batch).
            dimension_semantics=("parallel", "parallel", "arbitrary"),
            vmem_limit_bytes=vmem_limit,
        ),
        cost_estimate=pl.CostEstimate(
            flops=flops, transcendentals=0, bytes_accessed=bytes_accessed),
    )(dep_p, head_p, U_p, bias_p)

    if L_pad == L:
        return out_p        # no post-kernel slice pass when L is 128-aligned
    # Padding is now <128 rows/cols, so this slice touches little extra HBM.
    return out_p[:, :L, :L]


def arc_biaffine_ref(head, dep, U, bias=None):
    out = jnp.einsum("blh,hk,bmk->blm", dep, U, head,
                     precision=lax.Precision.HIGHEST)
    if bias is not None:
        out = out + jnp.einsum("bmh,h->bm", head, bias,
                               precision=lax.Precision.HIGHEST)[:, None, :]
    return out


if __name__ == "__main__":
    B, L, H = 2, 8, 32
    key = jax.random.PRNGKey(0)
    k_head, k_dep, k_u, k_b = jax.random.split(key, 4)

    head = jax.random.normal(k_head, (B, L, H), dtype=jnp.float32)
    dep = jax.random.normal(k_dep, (B, L, H), dtype=jnp.float32)
    # Deterministic parameter init (stand-in for initial_parameter()).
    U = jax.random.normal(k_u, (H, H), dtype=jnp.float32) * 0.1
    bias = jax.random.normal(k_b, (H,), dtype=jnp.float32) * 0.1

    ref = arc_biaffine_ref(head, dep, U, bias)
    ref_nb = arc_biaffine_ref(head, dep, U, None)

    # 1) Default bf16-MXU path (f32 accumulation).
    out = arc_biaffine(head, dep, U, bias)
    jax.block_until_ready(out)
    assert out.shape == (B, L, L)
    assert jnp.allclose(out, ref, atol=1e-1, rtol=5e-2), \
        float(jnp.max(jnp.abs(out - ref)))

    # 2) has_bias=False path.
    out_nb = arc_biaffine(head, dep, U, None)
    jax.block_until_ready(out_nb)
    assert jnp.allclose(out_nb, ref_nb, atol=1e-1, rtol=5e-2), \
        float(jnp.max(jnp.abs(out_nb - ref_nb)))

    # 3) Full-f32 precision path (for precision-sensitive consumers at large H).
    out_f32 = arc_biaffine(head, dep, U, bias, mxu_bf16=False)
    jax.block_until_ready(out_f32)
    assert jnp.allclose(out_f32, ref, atol=5e-3, rtol=5e-3), \
        float(jnp.max(jnp.abs(out_f32 - ref)))

    print("KERNEL_OK")
</pallas_src>

<mosaic_0001>
module attributes {stable_mosaic.version = 11 : i64} {
  func.func @_arc_biaffine_kernel(%arg0: i32, %arg1: i32, %arg2: i32, %arg3: memref<1x128x128xbf16, #tpu.memory_space<vmem>>, %arg4: memref<1x128x128xbf16, #tpu.memory_space<vmem>>, %arg5: memref<128x128xbf16, #tpu.memory_space<vmem>>, %arg6: memref<1x128xf32, #tpu.memory_space<vmem>>, %arg7: memref<1x128x128xf32, #tpu.memory_space<vmem>>, %arg8: memref<128x128xbf16, #tpu.memory_space<vmem>>) attributes {dimension_semantics = [#tpu.dimension_semantics<parallel>, #tpu.dimension_semantics<parallel>, #tpu.dimension_semantics<arbitrary>], iteration_bounds = array<i64: 2, 1, 1>, scalar_prefetch = 0 : i64, scratch_operands = 1 : i64, tpu.core_type = #tpu.core_type<tc>, window_params = [{transform_indices = @transform_0, window_bounds = array<i64: 1, 128, 128>}, {transform_indices = @transform_1, window_bounds = array<i64: 1, 128, 128>}, {pipeline_mode = #tpu.pipeline_mode<synchronous>, transform_indices = @transform_2, window_bounds = array<i64: 128, 128>}, {pipeline_mode = #tpu.pipeline_mode<synchronous>, transform_indices = @transform_3, window_bounds = array<i64: 1, 128>}, {transform_indices = @transform_4, window_bounds = array<i64: 1, 128, 128>}]} {
    %c0_i32 = arith.constant 0 : i32
    %0 = arith.cmpi eq, %arg2, %c0_i32 : i32
    %1 = arith.extui %0 : i1 to i32
    %c0_i32_0 = arith.constant 0 : i32
    %2 = arith.cmpi ne, %1, %c0_i32_0 : i32
    scf.if %2 {
      %c0_8 = arith.constant 0 : index
      %c0_9 = arith.constant 0 : index
      %c0_10 = arith.constant 0 : index
      %10 = vector.load %arg3[%c0_8, %c0_9, %c0_10] : memref<1x128x128xbf16, #tpu.memory_space<vmem>>, vector<1x128x128xbf16>
      %11 = vector.shape_cast %10 : vector<1x128x128xbf16> to vector<128x128xbf16>
      %c0_11 = arith.constant 0 : index
      %c0_12 = arith.constant 0 : index
      %12 = vector.load %arg5[%c0_11, %c0_12] : memref<128x128xbf16, #tpu.memory_space<vmem>>, vector<128x128xbf16>
      %cst_13 = arith.constant dense<0.000000e+00> : vector<128x128xf32>
      %13 = tpu.matmul %11, %12, %cst_13 {dimension_numbers = #tpu.dot_dimension_numbers<[1], [0], [0], [1], [0, 0, 1, 1], [], []>} : vector<128x128xbf16>, vector<128x128xbf16>, vector<128x128xf32> -> vector<128x128xf32>
      %c0_14 = arith.constant 0 : index
      %c0_15 = arith.constant 0 : index
      %14 = vector.load %arg6[%c0_14, %c0_15] : memref<1x128xf32, #tpu.memory_space<vmem>>, vector<1x128xf32>
      %15 = vector.broadcast %14 : vector<1x128xf32> to vector<128x128xf32>
      %16 = arith.addf %13, %15 : vector<128x128xf32>
      %17 = arith.truncf %16 : vector<128x128xf32> to vector<128x128xbf16>
      %c0_16 = arith.constant 0 : index
      %c0_17 = arith.constant 0 : index
      %18 = vector.load %arg8[%c0_16, %c0_17] : memref<128x128xbf16, #tpu.memory_space<vmem>>, vector<128x128xbf16>
      tpu.vector_store %arg8[%c0_16, %c0_17], %17 {strides = array<i32>} : memref<128x128xbf16, #tpu.memory_space<vmem>>, vector<128x128xbf16>,
    } else {
    }
    %c0 = arith.constant 0 : index
    %c0_1 = arith.constant 0 : index
    %3 = vector.load %arg8[%c0, %c0_1] : memref<128x128xbf16, #tpu.memory_space<vmem>>, vector<128x128xbf16>
    %c0_2 = arith.constant 0 : index
    %c0_3 = arith.constant 0 : index
    %c0_4 = arith.constant 0 : index
    %4 = vector.load %arg4[%c0_2, %c0_3, %c0_4] : memref<1x128x128xbf16, #tpu.memory_space<vmem>>, vector<1x128x128xbf16>
    %5 = vector.shape_cast %4 : vector<1x128x128xbf16> to vector<128x128xbf16>
    %cst = arith.constant dense<0.000000e+00> : vector<128x128xf32>
    %6 = tpu.matmul %3, %5, %cst {dimension_numbers = #tpu.dot_dimension_numbers<[1], [1], [0], [0], [0, 0, 1, 0], [], []>} : vector<128x128xbf16>, vector<128x128xbf16>, vector<128x128xf32> -> vector<128x128xf32>
    %c0_5 = arith.constant 0 : index
    %c0_6 = arith.constant 0 : index
    %c0_7 = arith.constant 0 : index
    %7 = vector.load %arg7[%c0_5, %c0_6, %c0_7] : memref<1x128x128xf32, #tpu.memory_space<vmem>>, vector<1x128x128xf32>
    %8 = vector.shape_cast %7 : vector<1x128x128xf32> to vector<128x128xf32>
    %9 = vector.shape_cast %6 : vector<128x128xf32> to vector<1x128x128xf32>
    tpu.vector_store %arg7[%c0_5, %c0_6, %c0_7], %9 {strides = array<i32>} : memref<1x128x128xf32, #tpu.memory_space<vmem>>, vector<1x128x128xf32>,
    return
  }
  func.func @transform_0(%arg0: i32, %arg1: i32, %arg2: i32) -> (i32, i32, i32) {
    %c0_i32 = arith.constant 0 : i32
    %c0_i32_0 = arith.constant 0 : i32
    return %arg0, %arg1, %c0_i32 : i32, i32, i32
  }
  func.func @transform_1(%arg0: i32, %arg1: i32, %arg2: i32) -> (i32, i32, i32) {
    %c0_i32 = arith.constant 0 : i32
    %c0_i32_0 = arith.constant 0 : i32
    return %arg0, %arg2, %c0_i32 : i32, i32, i32
  }
  func.func @transform_2(%arg0: i32, %arg1: i32, %arg2: i32) -> (i32, i32) {
    %c0_i32 = arith.constant 0 : i32
    %c0_i32_0 = arith.constant 0 : i32
    %c0_i32_1 = arith.constant 0 : i32
    return %c0_i32, %c0_i32_0 : i32, i32
  }
  func.func @transform_3(%arg0: i32, %arg1: i32, %arg2: i32) -> (i32, i32) {
    %c0_i32 = arith.constant 0 : i32
    %c0_i32_0 = arith.constant 0 : i32
    %c0_i32_1 = arith.constant 0 : i32
    return %c0_i32, %c0_i32_0 : i32, i32
  }
  func.func @transform_4(%arg0: i32, %arg1: i32, %arg2: i32) -> (i32, i32, i32) {
    %c0_i32 = arith.constant 0 : i32
    return %arg0, %arg1, %arg2 : i32, i32, i32
  }
}

</mosaic_0001>

<llo_original>
// kernel: tpu_custom_call.1
$region0: #{tpu_custom_call.1}
  #allocation0 [shape = 'u32[]', space=smem, size = 0x4, offset = 0x4, fixed_abs, tag = 'smem constant byte address 0x4 - core index']
  #allocation1 [shape = 'u32[72,128]{1,0:T(1,128)}', space=vmem, size = 0x9000, scoped, tag = 'internal scratch']
  #allocation2 [shape = 'bf16[128,128]{1,0:T(8,128)(2,1)}', space=vmem, size = 0x8000, scoped, tag = 'scratch operand']
  %s0 = inlined_call_operand.hbm [shape: bf16[2,128,128], index: 0, kind: input, shape index: {}]
  %s1 = inlined_call_operand.hbm [shape: bf16[2,128,128], index: 1, kind: input, shape index: {}]
  %s2 = inlined_call_operand.hbm [shape: bf16[128,128], index: 2, kind: input, shape index: {}]
  %s3 = inlined_call_operand.vmem [shape: f32[1,128], index: 3, kind: input, shape index: {}]
  %s4 = inlined_call_operand.hbm [shape: f32[2,128,128], index: 4, kind: output, shape index: {}]
  %s5 = sld [smem:[#allocation0]]
  $region65: #{tpu_custom_call.1} parent=0
    _
  %s7 = ssub.s32 1, %s5
  %s8 = scalar_select 0, %s7, %s5
  $region1: #{tpu_custom_call.1} parent=0
    #allocation3 [shape = 'u8[65536]{0}', space=vmem, size = 0x10000, scoped, tag = 'input window, operand 0']
    #allocation4 [shape = 's32[2]{0}', space=sflag, size = 0x8, scoped, tag = 'scoped memory for tpu_custom_call.1']
    #allocation5 [shape = 's32[2]{0}', space=sflag, size = 0x8, scoped, tag = 'scoped memory for tpu_custom_call.1']
    #allocation6 [shape = 'u8[65536]{0}', space=vmem, size = 0x10000, scoped, tag = 'input window, operand 1']
    #allocation7 [shape = 's32[2]{0}', space=sflag, size = 0x8, scoped, tag = 'scoped memory for tpu_custom_call.1']
    #allocation8 [shape = 'u8[32768]{0}', space=vmem, size = 0x8000, scoped, tag = 'input window, operand 2, single buffered']
    #allocation9 [shape = 'u8[131072]{0}', space=vmem, size = 0x20000, scoped, tag = 'output window, operand 0']
    %9 = vsyncpa [#allocation4], 0
    %s10 = scalar_lea.sflag [#allocation4], 1
    %11 = vsyncpa %s10, 0
    %12 = vsyncpa [#allocation7], 0
    %s13 = scalar_lea.sflag [#allocation7], 1
    %14 = vsyncpa %s13, 0
    %15 = vsyncpa [#allocation5], 0
    %s16 = scalar_lea.sflag [#allocation5], 1
    %17 = vsyncpa %s16, 0
    loop: start=0, step=1, limit=4
    $region2: #{tpu_custom_call.1} parent=1 // loop_pre_header
      _
    $region3: #{tpu_custom_call.1} parent=1 // loop_header
      %s19 = sphi 0, %s23
      %p20 = scmp.ge.s32.totalorder %s19, 4
      %s26 = sphi 0, %s45
      %s27 = sphi 0, %s41
      %s28 = sphi 0, %s37
      %s29 = sphi 0, %s26
      %s30 = sphi 0, %s27
      %s31 = sphi 0, %s28
      %s32 = sphi 0, %s29
      %s33 = sphi 0, %s30
      %s34 = sphi 0, %s31
      %s50 = sphi 0, %s52
      %s53 = sphi 0, %s50
      %s54 = sphi 0, %s53
      %s70 = sphi 0, %s54
      %s78 = sphi 0, %s80
      %s81 = sphi 0, %s78
      %s82 = sphi 0, %s81
      %s98 = sphi 0, %s82
      %s102 = sphi 0, %s102
      %s104 = sphi 0, %s102
      %s105 = sphi 0, %s104
      %s119 = sphi 0, %s105
      %s123 = sphi 0, %s123
      %s125 = sphi 0, %s123
      %s126 = sphi 0, %s125
      %s140 = sphi 0, %s126
      %s150 = sphi 0, %s152
      %s153 = sphi 0, %s150
      %s154 = sphi 0, %s153
      %s170 = sphi 0, %s154
    $region4: #{tpu_custom_call.1} parent=1 // loop_header_branch
      %22 = sbr.rel (%p20) target = $region8
    $region5: #{tpu_custom_call.1} parent=1 // loop_body
      %s24 = ssub.s32 %s19, 1
      %s25 = ssub.s32 %s19, 2
      %s35 = sadd.s32 1, %s28
      %p36 = scmp.ge.s32.totalorder %s35, 1
      %s37 = scalar_select %p36, 0, %s35
      %s38 = sadd.s32 1, %s27
      %s39 = scalar_select %p36, %s38, %s27
      %p40 = scmp.ge.s32.totalorder %s39, 1
      %s41 = scalar_select %p40, 0, %s39
      %s42 = sadd.s32 1, %s26
      %s43 = scalar_select %p40, %s42, %s26
      %p44 = scmp.ge.s32.totalorder %s43, 2
      %s45 = scalar_select %p44, 0, %s43
      %s46 = ssub.s32 %s26, %s45
      %s47 = ssub.s32 %s27, %s41
      %s48 = sor.u32 %s46, %s47
      %p49 = scmp.eq.s32.totalorder %s48, 0
      %s51 = sadd.s32 %s50, 1
      %s52 = scalar_select %p49, %s50, %s51
      %p55 = pneg %p49
      %p56 = scmp.eq.s32.totalorder %s19, 1
      %p57 = por %p55, %p56
      %p58 = scmp.ne.s32.totalorder %s50, %s53
      %p59 = scmp.eq.s32.totalorder %s19, 0
      %p60 = por %p58, %p59
      %p61 = scmp.ne.s32.totalorder %s50, %s53
      %p62 = scmp.eq.s32.totalorder %s24, 1
      %p63 = por %p61, %p62
      %p64 = scmp.ne.s32.totalorder %s53, %s54
      %p65 = scmp.eq.s32.totalorder %s24, 0
      %p66 = por %p64, %p65
      %p67 = scmp.ne.s32.totalorder %s53, %s54
      %p68 = scmp.eq.s32.totalorder %s25, 1
      %p69 = por %p67, %p68
      %p71 = scmp.ne.s32.totalorder %s54, %s70
      %p72 = scmp.eq.s32.totalorder %s25, 0
      %p73 = por %p71, %p72
      %s74 = ssub.s32 %s26, %s45
      %s75 = ssub.s32 %s28, %s37
      %s76 = sor.u32 %s74, %s75
      %p77 = scmp.eq.s32.totalorder %s76, 0
      %s79 = sadd.s32 %s78, 1
      %s80 = scalar_select %p77, %s78, %s79
      %p83 = pneg %p77
      %p84 = scmp.eq.s32.totalorder %s19, 1
      %p85 = por %p83, %p84
      %p86 = scmp.ne.s32.totalorder %s78, %s81
      %p87 = scmp.eq.s32.totalorder %s19, 0
      %p88 = por %p86, %p87
      %p89 = scmp.ne.s32.totalorder %s78, %s81
      %p90 = scmp.eq.s32.totalorder %s24, 1
      %p91 = por %p89, %p90
      %p92 = scmp.ne.s32.totalorder %s81, %s82
      %p93 = scmp.eq.s32.totalorder %s24, 0
      %p94 = por %p92, %p93
      %p95 = scmp.ne.s32.totalorder %s81, %s82
      %p96 = scmp.eq.s32.totalorder %s25, 1
      %p97 = por %p95, %p96
      %p99 = scmp.ne.s32.totalorder %s82, %s98
      %p100 = scmp.eq.s32.totalorder %s25, 0
      %p101 = por %p99, %p100
      %s103 = sadd.s32 %s102, 1
      %p106 = scmp.eq.s32.totalorder %s19, 1
      %p107 = scmp.ne.s32.totalorder %s102, %s104
      %p108 = scmp.eq.s32.totalorder %s19, 0
      %p109 = por %p107, %p108
      %p110 = scmp.ne.s32.totalorder %s102, %s104
      %p111 = scmp.eq.s32.totalorder %s24, 1
      %p112 = por %p110, %p111
      %p113 = scmp.ne.s32.totalorder %s104, %s105
      %p114 = scmp.eq.s32.totalorder %s24, 0
      %p115 = por %p113, %p114
      %p116 = scmp.ne.s32.totalorder %s104, %s105
      %p117 = scmp.eq.s32.totalorder %s25, 1
      %p118 = por %p116, %p117
      %p120 = scmp.ne.s32.totalorder %s105, %s119
      %p121 = scmp.eq.s32.totalorder %s25, 0
      %p122 = por %p120, %p121
      %s124 = sadd.s32 %s123, 1
      %p127 = scmp.eq.s32.totalorder %s19, 1
      %p128 = scmp.ne.s32.totalorder %s123, %s125
      %p129 = scmp.eq.s32.totalorder %s19, 0
      %p130 = por %p128, %p129
      %p131 = scmp.ne.s32.totalorder %s123, %s125
      %p132 = scmp.eq.s32.totalorder %s24, 1
      %p133 = por %p131, %p132
      %p134 = scmp.ne.s32.totalorder %s125, %s126
      %p135 = scmp.eq.s32.totalorder %s24, 0
      %p136 = por %p134, %p135
      %p137 = scmp.ne.s32.totalorder %s125, %s126
      %p138 = scmp.eq.s32.totalorder %s25, 1
      %p139 = por %p137, %p138
      %p141 = scmp.ne.s32.totalorder %s126, %s140
      %p142 = scmp.eq.s32.totalorder %s25, 0
      %p143 = por %p141, %p142
      %s144 = ssub.s32 %s26, %s45
      %s145 = ssub.s32 %s27, %s41
      %s146 = sor.u32 %s144, %s145
      %s147 = ssub.s32 %s28, %s37
      %s148 = sor.u32 %s146, %s147
      %p149 = scmp.eq.s32.totalorder %s148, 0
      %s151 = sadd.s32 %s150, 1
      %s152 = scalar_select %p149, %s150, %s151
      %p155 = pneg %p149
      %p156 = scmp.eq.s32.totalorder %s19, 1
      %p157 = por %p155, %p156
      %p158 = scmp.ne.s32.totalorder %s150, %s153
      %p159 = scmp.eq.s32.totalorder %s19, 0
      %p160 = por %p158, %p159
      %p161 = scmp.ne.s32.totalorder %s150, %s153
      %p162 = scmp.eq.s32.totalorder %s24, 1
      %p163 = por %p161, %p162
      %p164 = scmp.ne.s32.totalorder %s153, %s154
      %p165 = scmp.eq.s32.totalorder %s24, 0
      %p166 = por %p164, %p165
      %p167 = scmp.ne.s32.totalorder %s153, %s154
      %p168 = scmp.eq.s32.totalorder %s25, 1
      %p169 = por %p167, %p168
      %p171 = scmp.ne.s32.totalorder %s154, %s170
      %p172 = scmp.eq.s32.totalorder %s25, 0
      %p173 = por %p171, %p172
      %p174 = scmp.le.s32.totalorder 1, %s19
      %p175 = scmp.lt.s32.totalorder %s19, 3
      %p176 = pnand %p174, %p175
      %p177 = pneg %p176
      // Predicated region
      $region9: #{tpu_custom_call.1} parent=5 // pred_check
        _
      $region10: #{tpu_custom_call.1} parent=5 // pred_check_branch
        %179 = sbr.rel (%p176) target = $region12
      $region11: #{tpu_custom_call.1} parent=5 // pred_region
        %s180 = ssub.s32 %s19, 1
        // Predicated region
        $region13: #{tpu_custom_call.1} parent=11 // pred_check
          %p181 = pneg %p115
        $region14: #{tpu_custom_call.1} parent=11 // pred_check_branch
          %183 = sbr.rel (%p181) target = $region16
        $region15: #{tpu_custom_call.1} parent=11 // pred_region
          %185 = vsyncadd [#allocation7], 0
          %s186 = sshll.u32 %s2, 4
          %s187 = int_to_ptr.hbm [resolvable:$true] %s186
          %s188 = sshll.u32 [#allocation8], 4
          %s189 = int_to_ptr.vmem [resolvable:$true] %s188
          %194 = dma.hbm_to_vmem [thread:$0]  %s187, 1024, %s189, [#allocation7], 64, 64, 4
        $region16: #{tpu_custom_call.1} parent=11 // pred_fallthru
          _
        // Predicated region
        $region17: #{tpu_custom_call.1} parent=11 // pred_check
          %p195 = pneg %p136
        $region18: #{tpu_custom_call.1} parent=11 // pred_check_branch
          %197 = sbr.rel (%p195) target = $region20
        $region19: #{tpu_custom_call.1} parent=11 // pred_region
          _
        $region20: #{tpu_custom_call.1} parent=11 // pred_fallthru
          _
      $region12: #{tpu_custom_call.1} parent=5 // pred_fallthru
        _
      %p198 = scmp.lt.s32.totalorder %s19, 2
      // Predicated region
      $region21: #{tpu_custom_call.1} parent=5 // pred_check
        %p199 = pneg %p198
      $region22: #{tpu_custom_call.1} parent=5 // pred_check_branch
        %201 = sbr.rel (%p199) target = $region24
      $region23: #{tpu_custom_call.1} parent=5 // pred_region
        // Predicated region
        $region25: #{tpu_custom_call.1} parent=23 // pred_check
          %p202 = pneg %p60
        $region26: #{tpu_custom_call.1} parent=23 // pred_check_branch
          %204 = sbr.rel (%p202) target = $region28
        $region27: #{tpu_custom_call.1} parent=23 // pred_region
          %s205 = sand.u32 %s50, 1
          %s206 = scalar_lea.sflag [#allocation4], %s205
          %s207 = sand.u32 %s50, 1
          %s208 = smul.addr %s207, 64
          %s209 = scalar_lea.vmem [#allocation3], %s208
          %s210 = smul.u32 16, %s27
          %212 = vsyncadd %s206, 0
          %s213 = smul.addr %s26, 16
          %s214 = sadd.s32 %s210, %s213
          %s215 = smul.addr %s214, 4
          %s216 = scalar_lea.hbm %s0, %s215
          %s217 = sshll.u32 %s216, 4
          %s218 = int_to_ptr.hbm [resolvable:$true] %s217
          %s219 = sshll.u32 %s209, 4
          %s220 = int_to_ptr.vmem [resolvable:$true] %s219
          %225 = dma.hbm_to_vmem [thread:$0]  %s218, 1024, %s220, %s206, 64, 64, 4
        $region28: #{tpu_custom_call.1} parent=23 // pred_fallthru
          _
        // Predicated region
        $region29: #{tpu_custom_call.1} parent=23 // pred_check
          %p226 = pneg %p88
        $region30: #{tpu_custom_call.1} parent=23 // pred_check_branch
          %228 = sbr.rel (%p226) target = $region32
        $region31: #{tpu_custom_call.1} parent=23 // pred_region
          %s229 = sand.u32 %s19, 1
          %s230 = scalar_lea.sflag [#allocation7], %s229
          %s231 = sand.u32 %s78, 1
          %s232 = smul.addr %s231, 64
          %s233 = scalar_lea.vmem [#allocation6], %s232
          %s234 = smul.u32 16, %s28
          %236 = vsyncadd %s230, 0
          %s237 = smul.addr %s26, 16
          %s238 = sadd.s32 %s234, %s237
          %s239 = smul.addr %s238, 4
          %s240 = scalar_lea.hbm %s1, %s239
          %s241 = sshll.u32 %s240, 4
          %s242 = int_to_ptr.hbm [resolvable:$true] %s241
          %s243 = sshll.u32 %s233, 4
          %s244 = int_to_ptr.vmem [resolvable:$true] %s243
          %249 = dma.hbm_to_vmem [thread:$0]  %s242, 1024, %s244, %s230, 64, 64, 4
        $region32: #{tpu_custom_call.1} parent=23 // pred_fallthru
          _
      $region24: #{tpu_custom_call.1} parent=5 // pred_fallthru
        _
      %p250 = scmp.le.s32.totalorder 1, %s19
      %p251 = scmp.lt.s32.totalorder %s19, 3
      %p252 = pnand %p250, %p251
      %p253 = pneg %p252
      // Predicated region
      $region33: #{tpu_custom_call.1} parent=5 // pred_check
        _
      $region34: #{tpu_custom_call.1} parent=5 // pred_check_branch
        %255 = sbr.rel (%p252) target = $region36
      $region35: #{tpu_custom_call.1} parent=5 // pred_region
        %s256 = ssub.s32 %s19, 1
        %s257 = sand.u32 %s53, 1
        %s258 = scalar_lea.sflag [#allocation4], %s257
        %s259 = sand.u32 %s53, 1
        %s260 = smul.addr %s259, 64
        %s261 = scalar_lea.vmem [#allocation3], %s260
        // Predicated region
        $region37: #{tpu_custom_call.1} parent=35 // pred_check
          %p262 = pneg %p66
        $region38: #{tpu_custom_call.1} parent=35 // pred_check_branch
          %264 = sbr.rel (%p262) target = $region40
        $region39: #{tpu_custom_call.1} parent=35 // pred_region
          %266 = dma.done %s258, 1024
        $region40: #{tpu_custom_call.1} parent=35 // pred_fallthru
          _
        %s267 = sand.u32 %s24, 1
        %s268 = scalar_lea.sflag [#allocation7], %s267
        %s269 = sand.u32 %s81, 1
        %s270 = smul.addr %s269, 64
        %s271 = scalar_lea.vmem [#allocation6], %s270
        // Predicated region
        $region41: #{tpu_custom_call.1} parent=35 // pred_check
          %p272 = pneg %p94
        $region42: #{tpu_custom_call.1} parent=35 // pred_check_branch
          %274 = sbr.rel (%p272) target = $region44
        $region43: #{tpu_custom_call.1} parent=35 // pred_region
          %276 = dma.done %s268, 1024
        $region44: #{tpu_custom_call.1} parent=35 // pred_fallthru
          _
        // Predicated region
        $region45: #{tpu_custom_call.1} parent=35 // pred_check
          %p277 = pneg %p115
        $region46: #{tpu_custom_call.1} parent=35 // pred_check_branch
          %279 = sbr.rel (%p277) target = $region48
        $region47: #{tpu_custom_call.1} parent=35 // pred_region
          %281 = dma.done [#allocation7], 1024
        $region48: #{tpu_custom_call.1} parent=35 // pred_fallthru
          _
        %s282 = sand.u32 %s53, 1
        %s283 = scalar_lea.sflag [#allocation4], %s282
        %s284 = sand.u32 %s53, 1
        %s285 = smul.addr %s284, 64
        %s286 = scalar_lea.vmem [#allocation3], %s285
        %p287 = pneg %p66
        %p288 = pneg %p63
        %s289 = sand.u32 %s24, 1
        %s290 = scalar_lea.sflag [#allocation7], %s289
        %s291 = sand.u32 %s81, 1
        %s292 = smul.addr %s291, 64
        %s293 = scalar_lea.vmem [#allocation6], %s292
        %p294 = pneg %p94
        %p295 = pneg %p91
        %p296 = pneg %p115
        %p297 = pneg %p112
        %p298 = pneg %p136
        %p299 = pneg %p133
        %p300 = pneg %p166
        %p301 = pneg %p163
        %s302 = sand.u32 %s153, 1
        %s303 = scalar_lea.sflag [#allocation5], %s302
        %s304 = sand.u32 %s153, 1
        %s305 = smul.addr %s304, 128
        %s306 = scalar_lea.vmem [#allocation9], %s305
        %s307 = smul.u32 16, %s30
        %s308 = smul.u32 16, %s31
        %s309 = smul.u32 16, %s30
        %p310 = scmp.eq.s32.totalorder %s31, 0
        // Predicated region
        $region49: #{tpu_custom_call.1} parent=35 // pred_check
          %p311 = pneg %p310
        $region50: #{tpu_custom_call.1} parent=35 // pred_check_branch
          %313 = sbr.rel (%p311) target = $region52
        $region51: #{tpu_custom_call.1} parent=35 // pred_region
          %v314 = vld [vmem:[%s261] sm:$0xf]
          %v315 = vld [vmem:[%s261 + $0x4] sm:$0xf]
          %v316 = vld [vmem:[%s261 + $0x8] sm:$0xf]
          %v317 = vld [vmem:[%s261 + $0xc] sm:$0xf]
          %v318 = vld [vmem:[%s261 + $0x10] sm:$0xf]
          %v319 = vld [vmem:[%s261 + $0x14] sm:$0xf]
          %v320 = vld [vmem:[%s261 + $0x18] sm:$0xf]
          %v321 = vld [vmem:[%s261 + $0x1c] sm:$0xf]
          %v322 = vld [vmem:[%s261 + $0x20] sm:$0xf]
          %v323 = vld [vmem:[%s261 + $0x24] sm:$0xf]
          %v324 = vld [vmem:[%s261 + $0x28] sm:$0xf]
          %v325 = vld [vmem:[%s261 + $0x2c] sm:$0xf]
          %v326 = vld [vmem:[%s261 + $0x30] sm:$0xf]
          %v327 = vld [vmem:[%s261 + $0x34] sm:$0xf]
          %v328 = vld [vmem:[%s261 + $0x38] sm:$0xf]
          %v329 = vld [vmem:[%s261 + $0x3c] sm:$0xf]
          %v330 = vld [vmem:[#allocation8] sm:$0xf]
          %v331 = vld [vmem:[#allocation8 + $0x4] sm:$0xf]
          %v332 = vld [vmem:[#allocation8 + $0x8] sm:$0xf]
          %v333 = vld [vmem:[#allocation8 + $0xc] sm:$0xf]
          %v334 = vld [vmem:[#allocation8 + $0x10] sm:$0xf]
          %v335 = vld [vmem:[#allocation8 + $0x14] sm:$0xf]
          %v336 = vld [vmem:[#allocation8 + $0x18] sm:$0xf]
          %v337 = vld [vmem:[#allocation8 + $0x1c] sm:$0xf]
          %v338 = vld [vmem:[#allocation8 + $0x20] sm:$0xf]
          %v339 = vld [vmem:[#allocation8 + $0x24] sm:$0xf]
          %v340 = vld [vmem:[#allocation8 + $0x28] sm:$0xf]
          %v341 = vld [vmem:[#allocation8 + $0x2c] sm:$0xf]
          %v342 = vld [vmem:[#allocation8 + $0x30] sm:$0xf]
          %v343 = vld [vmem:[#allocation8 + $0x34] sm:$0xf]
          %v344 = vld [vmem:[#allocation8 + $0x38] sm:$0xf]
          %v345 = vld [vmem:[#allocation8 + $0x3c] sm:$0xf]
          %v346 = vld [vmem:[%s3] sm:$0x1]
          %v348 = vperm.slane %v346, 0
          %v366 = vunpack.c.l.b16 %v314
          %v367 = vunpack.c.l.b16 %v315
          %v368 = vunpack.c.l.b16 %v316
          %v369 = vunpack.c.l.b16 %v317
          %v370 = vunpack.c.l.b16 %v318
          %v371 = vunpack.c.l.b16 %v319
          %v372 = vunpack.c.l.b16 %v320
          %v373 = vunpack.c.l.b16 %v321
          %v374 = vunpack.c.l.b16 %v322
          %v375 = vunpack.c.l.b16 %v323
          %v376 = vunpack.c.l.b16 %v324
          %v377 = vunpack.c.l.b16 %v325
          %v378 = vunpack.c.l.b16 %v326
          %v379 = vunpack.c.l.b16 %v327
          %v380 = vunpack.c.l.b16 %v328
          %v381 = vunpack.c.l.b16 %v329
          %v382 = vpack.c.b16 %v367, %v366
          %v383 = vpack.c.b16 %v369, %v368
          %v384 = vpack.c.b16 %v371, %v370
          %v385 = vpack.c.b16 %v373, %v372
          %v386 = vpack.c.b16 %v375, %v374
          %v387 = vpack.c.b16 %v377, %v376
          %v388 = vpack.c.b16 %v379, %v378
          %v389 = vpack.c.b16 %v381, %v380
          %v414 = vunpack.c.l.b16 %v330
          %v415 = vunpack.c.l.b16 %v331
          %v416 = vunpack.c.l.b16 %v332
          %v417 = vunpack.c.l.b16 %v333
          %v418 = vunpack.c.l.b16 %v334
          %v419 = vunpack.c.l.b16 %v335
          %v420 = vunpack.c.l.b16 %v336
          %v421 = vunpack.c.l.b16 %v337
          %v422 = vunpack.c.l.b16 %v338
          %v423 = vunpack.c.l.b16 %v339
          %v424 = vunpack.c.l.b16 %v340
          %v425 = vunpack.c.l.b16 %v341
          %v426 = vunpack.c.l.b16 %v342
          %v427 = vunpack.c.l.b16 %v343
          %v428 = vunpack.c.l.b16 %v344
          %v429 = vunpack.c.l.b16 %v345
          %v430 = vpack.c.b16 %v415, %v414
          %v431 = vpack.c.b16 %v417, %v416
          %v432 = vpack.c.b16 %v419, %v418
          %v433 = vpack.c.b16 %v421, %v420
          %v434 = vpack.c.b16 %v423, %v422
          %v435 = vpack.c.b16 %v425, %v424
          %v436 = vpack.c.b16 %v427, %v426
          %v437 = vpack.c.b16 %v429, %v428
          %446 = vmatpush.bf16.msra.mxu0 %v437
          %447 = vmatpush.bf16.msra.mxu0 %v436
          %448 = vmatpush.bf16.msra.mxu0 %v435
          %449 = vmatpush.bf16.msra.mxu0 %v434
          %450 = vmatpush.bf16.msra.mxu0 %v433
          %451 = vmatpush.bf16.msra.mxu0 %v432
          %452 = vmatpush.bf16.msra.mxu0 %v431
          %453 = vmatpush.bf16.msra.mxu0 %v430
          %454 = vmatmul.bf16.gmra.mxu0 %v382
          %v455 = vpop.f32.mrf.mxu0
          %v456 = vadd.f32 %v348, %v455
          %v457 = vpop.f32.mrf.mxu0
          %v458 = vadd.f32 %v348, %v457
          %459 = vmatmul.bf16.gmra.mxu0 %v383
          %v460 = vpop.f32.mrf.mxu0
          %v461 = vadd.f32 %v348, %v460
          %v462 = vpop.f32.mrf.mxu0
          %v463 = vadd.f32 %v348, %v462
          %464 = vmatmul.bf16.gmra.mxu0 %v384
          %v465 = vpop.f32.mrf.mxu0
          %v466 = vadd.f32 %v348, %v465
          %v467 = vpop.f32.mrf.mxu0
          %v468 = vadd.f32 %v348, %v467
          %469 = vmatmul.bf16.gmra.mxu0 %v385
          %v470 = vpop.f32.mrf.mxu0
          %v471 = vadd.f32 %v348, %v470
          %v472 = vpop.f32.mrf.mxu0
          %v473 = vadd.f32 %v348, %v472
          %474 = vmatmul.bf16.gmra.mxu0 %v386
          %v475 = vpop.f32.mrf.mxu0
          %v476 = vadd.f32 %v348, %v475
          %v477 = vpop.f32.mrf.mxu0
          %v478 = vadd.f32 %v348, %v477
          %479 = vmatmul.bf16.gmra.mxu0 %v387
          %v480 = vpop.f32.mrf.mxu0
          %v481 = vadd.f32 %v348, %v480
          %v482 = vpop.f32.mrf.mxu0
          %v483 = vadd.f32 %v348, %v482
          %484 = vmatmul.bf16.gmra.mxu0 %v388
          %v485 = vpop.f32.mrf.mxu0
          %v486 = vadd.f32 %v348, %v485
          %v487 = vpop.f32.mrf.mxu0
          %v488 = vadd.f32 %v348, %v487
          %489 = vmatmul.bf16.gmra.mxu0 %v389
          %v490 = vpop.f32.mrf.mxu0
          %v491 = vadd.f32 %v348, %v490
          %v492 = vpop.f32.mrf.mxu0
          %v493 = vadd.f32 %v348, %v492
          %494 = vdwg.mxu0
          %v495 = vpack.c.bf16 %v456, %v456
          %v496 = vpack.c.bf16 %v458, %v458
          %v497 = vpack.c.bf16 %v461, %v461
          %v498 = vpack.c.bf16 %v463, %v463
          %v499 = vpack.c.bf16 %v466, %v466
          %v500 = vpack.c.bf16 %v468, %v468
          %v501 = vpack.c.bf16 %v471, %v471
          %v502 = vpack.c.bf16 %v473, %v473
          %v503 = vpack.c.bf16 %v476, %v476
          %v504 = vpack.c.bf16 %v478, %v478
          %v505 = vpack.c.bf16 %v481, %v481
          %v506 = vpack.c.bf16 %v483, %v483
          %v507 = vpack.c.bf16 %v486, %v486
          %v508 = vpack.c.bf16 %v488, %v488
          %v509 = vpack.c.bf16 %v491, %v491
          %v510 = vpack.c.bf16 %v493, %v493
          %511 = vst [vmem:[#allocation2] sm:$0xf] %v495
          %512 = vst [vmem:[#allocation2 + $0x4] sm:$0xf] %v496
          %513 = vst [vmem:[#allocation2 + $0x8] sm:$0xf] %v497
          %514 = vst [vmem:[#allocation2 + $0xc] sm:$0xf] %v498
          %515 = vst [vmem:[#allocation2 + $0x10] sm:$0xf] %v499
          %516 = vst [vmem:[#allocation2 + $0x14] sm:$0xf] %v500
          %517 = vst [vmem:[#allocation2 + $0x18] sm:$0xf] %v501
          %518 = vst [vmem:[#allocation2 + $0x1c] sm:$0xf] %v502
          %519 = vst [vmem:[#allocation2 + $0x20] sm:$0xf] %v503
          %520 = vst [vmem:[#allocation2 + $0x24] sm:$0xf] %v504
          %521 = vst [vmem:[#allocation2 + $0x28] sm:$0xf] %v505
          %522 = vst [vmem:[#allocation2 + $0x2c] sm:$0xf] %v506
          %523 = vst [vmem:[#allocation2 + $0x30] sm:$0xf] %v507
          %524 = vst [vmem:[#allocation2 + $0x34] sm:$0xf] %v508
          %525 = vst [vmem:[#allocation2 + $0x38] sm:$0xf] %v509
          %526 = vst [vmem:[#allocation2 + $0x3c] sm:$0xf] %v510
        $region52: #{tpu_custom_call.1} parent=35 // pred_fallthru
          _
        %v527 = vld [vmem:[#allocation2] sm:$0xf]
        %v528 = vld [vmem:[#allocation2 + $0x4] sm:$0xf]
        %v529 = vld [vmem:[#allocation2 + $0x8] sm:$0xf]
        %v530 = vld [vmem:[#allocation2 + $0xc] sm:$0xf]
        %v531 = vld [vmem:[#allocation2 + $0x10] sm:$0xf]
        %v532 = vld [vmem:[#allocation2 + $0x14] sm:$0xf]
        %v533 = vld [vmem:[#allocation2 + $0x18] sm:$0xf]
        %v534 = vld [vmem:[#allocation2 + $0x1c] sm:$0xf]
        %v535 = vld [vmem:[#allocation2 + $0x20] sm:$0xf]
        %v536 = vld [vmem:[#allocation2 + $0x24] sm:$0xf]
        %v537 = vld [vmem:[#allocation2 + $0x28] sm:$0xf]
        %v538 = vld [vmem:[#allocation2 + $0x2c] sm:$0xf]
        %v539 = vld [vmem:[#allocation2 + $0x30] sm:$0xf]
        %v540 = vld [vmem:[#allocation2 + $0x34] sm:$0xf]
        %v541 = vld [vmem:[#allocation2 + $0x38] sm:$0xf]
        %v542 = vld [vmem:[#allocation2 + $0x3c] sm:$0xf]
        %v543 = vld [vmem:[%s271] sm:$0xf]
        %v544 = vld [vmem:[%s271 + $0x4] sm:$0xf]
        %v545 = vld [vmem:[%s271 + $0x8] sm:$0xf]
        %v546 = vld [vmem:[%s271 + $0xc] sm:$0xf]
        %v547 = vld [vmem:[%s271 + $0x10] sm:$0xf]
        %v548 = vld [vmem:[%s271 + $0x14] sm:$0xf]
        %v549 = vld [vmem:[%s271 + $0x18] sm:$0xf]
        %v550 = vld [vmem:[%s271 + $0x1c] sm:$0xf]
        %v551 = vld [vmem:[%s271 + $0x20] sm:$0xf]
        %v552 = vld [vmem:[%s271 + $0x24] sm:$0xf]
        %v553 = vld [vmem:[%s271 + $0x28] sm:$0xf]
        %v554 = vld [vmem:[%s271 + $0x2c] sm:$0xf]
        %v555 = vld [vmem:[%s271 + $0x30] sm:$0xf]
        %v556 = vld [vmem:[%s271 + $0x34] sm:$0xf]
        %v557 = vld [vmem:[%s271 + $0x38] sm:$0xf]
        %v558 = vld [vmem:[%s271 + $0x3c] sm:$0xf]
        %v575 = vunpack.c.l.b16 %v527
        %v576 = vunpack.c.l.b16 %v528
        %v577 = vunpack.c.l.b16 %v529
        %v578 = vunpack.c.l.b16 %v530
        %v579 = vunpack.c.l.b16 %v531
        %v580 = vunpack.c.l.b16 %v532
        %v581 = vunpack.c.l.b16 %v533
        %v582 = vunpack.c.l.b16 %v534
        %v583 = vunpack.c.l.b16 %v535
        %v584 = vunpack.c.l.b16 %v536
        %v585 = vunpack.c.l.b16 %v537
        %v586 = vunpack.c.l.b16 %v538
        %v587 = vunpack.c.l.b16 %v539
        %v588 = vunpack.c.l.b16 %v540
        %v589 = vunpack.c.l.b16 %v541
        %v590 = vunpack.c.l.b16 %v542
        %v591 = vpack.c.b16 %v576, %v575
        %v592 = vpack.c.b16 %v578, %v577
        %v593 = vpack.c.b16 %v580, %v579
        %v594 = vpack.c.b16 %v582, %v581
        %v595 = vpack.c.b16 %v584, %v583
        %v596 = vpack.c.b16 %v586, %v585
        %v597 = vpack.c.b16 %v588, %v587
        %v598 = vpack.c.b16 %v590, %v589
        %v623 = vunpack.c.l.b16 %v543
        %v624 = vunpack.c.l.b16 %v544
        %v625 = vunpack.c.l.b16 %v545
        %v626 = vunpack.c.l.b16 %v546
        %v627 = vunpack.c.l.b16 %v547
        %v628 = vunpack.c.l.b16 %v548
        %v629 = vunpack.c.l.b16 %v549
        %v630 = vunpack.c.l.b16 %v550
        %v631 = vunpack.c.l.b16 %v551
        %v632 = vunpack.c.l.b16 %v552
        %v633 = vunpack.c.l.b16 %v553
        %v634 = vunpack.c.l.b16 %v554
        %v635 = vunpack.c.l.b16 %v555
        %v636 = vunpack.c.l.b16 %v556
        %v637 = vunpack.c.l.b16 %v557
        %v638 = vunpack.c.l.b16 %v558
        %v639 = vpack.c.b16 %v624, %v623
        %v640 = vpack.c.b16 %v626, %v625
        %v641 = vpack.c.b16 %v628, %v627
        %v642 = vpack.c.b16 %v630, %v629
        %v643 = vpack.c.b16 %v632, %v631
        %v644 = vpack.c.b16 %v634, %v633
        %v645 = vpack.c.b16 %v636, %v635
        %v646 = vpack.c.b16 %v638, %v637
        %655 = vmatpush.bf16.xpose.msra.mxu0 %v646
        %656 = vmatpush.bf16.xpose.msra.mxu0 %v645
        %657 = vmatpush.bf16.xpose.msra.mxu0 %v644
        %658 = vmatpush.bf16.xpose.msra.mxu0 %v643
        %659 = vmatpush.bf16.xpose.msra.mxu0 %v642
        %660 = vmatpush.bf16.xpose.msra.mxu0 %v641
        %661 = vmatpush.bf16.xpose.msra.mxu0 %v640
        %662 = vmatpush.bf16.xpose.msra.mxu0 %v639
        %663 = vmatmul.bf16.gmra.mxu0 %v591
        %v664 = vpop.f32.mrf.mxu0
        %v665 = vadd.f32 0.0, %v664
        %v666 = vpop.f32.mrf.mxu0
        %v667 = vadd.f32 0.0, %v666
        %668 = vmatmul.bf16.gmra.mxu0 %v592
        %v669 = vpop.f32.mrf.mxu0
        %v670 = vadd.f32 0.0, %v669
        %v671 = vpop.f32.mrf.mxu0
        %v672 = vadd.f32 0.0, %v671
        %673 = vmatmul.bf16.gmra.mxu0 %v593
        %v674 = vpop.f32.mrf.mxu0
        %v675 = vadd.f32 0.0, %v674
        %v676 = vpop.f32.mrf.mxu0
        %v677 = vadd.f32 0.0, %v676
        %678 = vmatmul.bf16.gmra.mxu0 %v594
        %v679 = vpop.f32.mrf.mxu0
        %v680 = vadd.f32 0.0, %v679
        %v681 = vpop.f32.mrf.mxu0
        %v682 = vadd.f32 0.0, %v681
        %683 = vmatmul.bf16.gmra.mxu0 %v595
        %v684 = vpop.f32.mrf.mxu0
        %v685 = vadd.f32 0.0, %v684
        %v686 = vpop.f32.mrf.mxu0
        %v687 = vadd.f32 0.0, %v686
        %688 = vmatmul.bf16.gmra.mxu0 %v596
        %v689 = vpop.f32.mrf.mxu0
        %v690 = vadd.f32 0.0, %v689
        %v691 = vpop.f32.mrf.mxu0
        %v692 = vadd.f32 0.0, %v691
        %693 = vmatmul.bf16.gmra.mxu0 %v597
        %v694 = vpop.f32.mrf.mxu0
        %v695 = vadd.f32 0.0, %v694
        %v696 = vpop.f32.mrf.mxu0
        %v697 = vadd.f32 0.0, %v696
        %698 = vmatmul.bf16.gmra.mxu0 %v598
        %v699 = vpop.f32.mrf.mxu0
        %v700 = vadd.f32 0.0, %v699
        %v701 = vpop.f32.mrf.mxu0
        %v702 = vadd.f32 0.0, %v701
        %703 = vdwg.mxu0
        %704 = vst [vmem:[%s306] sm:$0xff] %v665
        %705 = vst [vmem:[%s306 + $0x8] sm:$0xff] %v667
        %706 = vst [vmem:[%s306 + $0x10] sm:$0xff] %v670
        %707 = vst [vmem:[%s306 + $0x18] sm:$0xff] %v672
        %708 = vst [vmem:[%s306 + $0x20] sm:$0xff] %v675
        %709 = vst [vmem:[%s306 + $0x28] sm:$0xff] %v677
        %710 = vst [vmem:[%s306 + $0x30] sm:$0xff] %v680
        %711 = vst [vmem:[%s306 + $0x38] sm:$0xff] %v682
        %712 = vst [vmem:[%s306 + $0x40] sm:$0xff] %v685
        %713 = vst [vmem:[%s306 + $0x48] sm:$0xff] %v687
        %714 = vst [vmem:[%s306 + $0x50] sm:$0xff] %v690
        %715 = vst [vmem:[%s306 + $0x58] sm:$0xff] %v692
        %716 = vst [vmem:[%s306 + $0x60] sm:$0xff] %v695
        %717 = vst [vmem:[%s306 + $0x68] sm:$0xff] %v697
        %718 = vst [vmem:[%s306 + $0x70] sm:$0xff] %v700
        %719 = vst [vmem:[%s306 + $0x78] sm:$0xff] %v702
        %s720 = sand.u32 %s153, 1
        %s721 = scalar_lea.sflag [#allocation5], %s720
        %s722 = sand.u32 %s153, 1
        %s723 = smul.addr %s722, 128
        %s724 = scalar_lea.vmem [#allocation9], %s723
        // Predicated region
        $region53: #{tpu_custom_call.1} parent=35 // pred_check
          %p725 = pneg %p163
        $region54: #{tpu_custom_call.1} parent=35 // pred_check_branch
          %727 = sbr.rel (%p725) target = $region56
        $region55: #{tpu_custom_call.1} parent=35 // pred_region
          %s728 = smul.u32 16, %s30
          %730 = vsyncadd %s721, 0
          %s731 = sadd.s32 %s31, %s728
          %s732 = smul.addr %s29, 16
          %s733 = sadd.s32 %s731, %s732
          %s734 = smul.addr %s733, 8
          %s735 = scalar_lea.hbm %s4, %s734
          %s736 = sshll.u32 %s724, 4
          %s737 = int_to_ptr.vmem [resolvable:$true] %s736
          %s738 = sshll.u32 %s735, 4
          %s739 = int_to_ptr.hbm [resolvable:$true] %s738
          %744 = dma.vmem_to_hbm [thread:$0]  %s737, 2048, %s739, %s721, 128, 128, 8
        $region56: #{tpu_custom_call.1} parent=35 // pred_fallthru
          _
      $region36: #{tpu_custom_call.1} parent=5 // pred_fallthru
        _
      %p745 = scmp.le.s32.totalorder 2, %s19
      // Predicated region
      $region57: #{tpu_custom_call.1} parent=5 // pred_check
        %p746 = pneg %p745
      $region58: #{tpu_custom_call.1} parent=5 // pred_check_branch
        %748 = sbr.rel (%p746) target = $region60
      $region59: #{tpu_custom_call.1} parent=5 // pred_region
        %s749 = ssub.s32 %s19, 2
        // Predicated region
        $region61: #{tpu_custom_call.1} parent=59 // pred_check
          %p750 = pneg %p169
        $region62: #{tpu_custom_call.1} parent=59 // pred_check_branch
          %752 = sbr.rel (%p750) target = $region64
        $region63: #{tpu_custom_call.1} parent=59 // pred_region
          %s753 = sand.u32 %s154, 1
          %s754 = scalar_lea.sflag [#allocation5], %s753
          %s755 = sand.u32 %s154, 1
          %s756 = smul.addr %s755, 128
          %s757 = scalar_lea.vmem [#allocation9], %s756
          %759 = dma.done %s754, 2048
        $region64: #{tpu_custom_call.1} parent=59 // pred_fallthru
          _
      $region60: #{tpu_custom_call.1} parent=5 // pred_fallthru
        _
    $region6: #{tpu_custom_call.1} parent=1 // loop_footer
      %s23 = sadd.s32 1, %s19
    $region7: #{tpu_custom_call.1} parent=1 // loop_footer_branch
      %18 = sbr.rel target = $region3
    $region8: #{tpu_custom_call.1} parent=1 // loop_exit
      _
    %760 = vsyncpa [#allocation4], 1
    %s761 = scalar_lea.sflag [#allocation4], 1
    %762 = vsyncpa %s761, 1
    %763 = vsyncpa [#allocation7], 1
    %s764 = scalar_lea.sflag [#allocation7], 1
    %765 = vsyncpa %s764, 1
    %766 = vsyncpa [#allocation5], 1
    %s767 = scalar_lea.sflag [#allocation5], 1
    %768 = vsyncpa %s767, 1

</llo_original>
